<compile_context>
chip_gen: v6e
topology: v6e:2x2x1
jax: 0.10.0
libtpu: 0.0.40
codegen_flags: <defaults>
</compile_context>

<pallas_src>
import functools
import math

import jax
import jax.numpy as jnp
import numpy as np
from jax.experimental import pallas as pl
from jax.experimental.pallas import tpu as pltpu


# ----------------------------- in-kernel helpers -----------------------------

def _gelu_tanh(x):
    # TODO(synk): PyTorch nn.GELU default is the exact erf formulation; erf lowering in
    # Mosaic is not guaranteed, so the tanh approximation is used here.
    c = math.sqrt(2.0 / math.pi)
    return 0.5 * x * (1.0 + jnp.tanh(c * (x + 0.044715 * x * x * x)))


# --------------------------------- kernel ------------------------------------

def _s4d_wrapper_kernel(x_ref, m_ref, kmat_ref, w_ref, b_ref, lnw_ref, lnb_ref,
                        o_ref, acc_ref, *, prenorm, d_real, seq_chunk):
    nb, seq_len, dp = x_ref.shape
    j = pl.program_id(1)
    nj = pl.num_programs(1)

    lnw = lnw_ref[...]                               # (1, Dp); zero in padded lanes
    lnb = lnb_ref[...]                               # (1, Dp)
    inv_d = 1.0 / float(d_real)

    def layer_norm(v):
        # Padded feature lanes of `v` are exactly zero, so sum/D gives the true mean.
        # Two-pass (centered) variance with a lane-validity mask avoids both the padded
        # lanes and the E[x^2]-E[x]^2 cancellation issue.
        mu = jnp.sum(v, axis=-1, keepdims=True) * inv_d
        lane = jax.lax.broadcasted_iota(jnp.int32, v.shape, v.ndim - 1)
        c = jnp.where(lane < d_real, v - mu, 0.0)
        var = jnp.sum(c * c, axis=-1, keepdims=True) * inv_d
        return c * jax.lax.rsqrt(var + 1e-5) * lnw + lnb

    # ----- accumulator init (start of the j reduction for this batch tile) -----
    @pl.when(j == 0)
    def _():
        acc_ref[...] = jnp.zeros_like(acc_ref)

    # ----- this chunk's masked (and optionally pre-normed) input state ---------
    j0 = pl.multiple_of(j * seq_chunk, seq_chunk)
    x_chunk = x_ref[:, pl.ds(j0, seq_chunk), :]      # (Nb, Sj, Dp) f32
    st = layer_norm(x_chunk) if prenorm else x_chunk
    st = st * m_ref[...]                             # (Nb, Sj, 1) prefix-length mask

    # ----- bidirectional depthwise Toeplitz conv (D skip folded into diagonal) -
    # kmat chunk is (Sj, S, Dp) bf16 in VMEM; upcast once per chunk (hoisted out of the
    # inner loop) and accumulate in f32.  Inner loop is a short static loop over the
    # chunk's Sj input positions; outer scaling lives on the grid's j axis.
    kchunk = kmat_ref[...].astype(jnp.float32)       # (Sj, S, Dp)
    partial = kchunk[0][None, :, :] * st[:, 0:1, :]  # (Nb, S, Dp)
    for jj in range(1, seq_chunk):
        partial = partial + kchunk[jj][None, :, :] * st[:, jj:jj + 1, :]
    acc_ref[...] += partial

    # ----- finalize: GELU -> fused GLU projection -> residual -> (post)norm ----
    @pl.when(j == nj - 1)
    def _():
        y = _gelu_tanh(acc_ref[...])                 # (Nb, S, Dp) f32
        # MXU matmul in bf16 with f32 accumulation (fused value|gate weight).
        y2 = y.reshape(nb * seq_len, dp).astype(jnp.bfloat16)
        z = jnp.dot(y2, w_ref[...], preferred_element_type=jnp.float32) + b_ref[...]
        z_lin = z[:, :dp]
        z_gate = z[:, dp:]
        gate = pl.reciprocal(1.0 + jnp.exp(-z_gate), approx=True)   # sigmoid via EUP
        out = (z_lin * gate).reshape(nb, seq_len, dp)

        # Wrapper: dropout (identity at inference) + residual + (post)norm.
        state = out + x_ref[...]                     # residual re-read, short live range
        if not prenorm:
            state = layer_norm(state)
        o_ref[...] = state


# ------------------- S4D kernel construction (host-side, numpy) ---------------

def _compute_bidir_ssm_kernel(log_dt, log_A_real, A_imag, Bp, Cp, S):
    """Diagonal SSM kernel, bilinear discretization. Returns K of shape (2, H, S)."""
    log_dt = np.asarray(log_dt, dtype=np.float64)
    log_A_real = np.asarray(log_A_real, dtype=np.float64)
    A_imag = np.asarray(A_imag, dtype=np.float64)
    Bp = np.asarray(Bp)
    Cp = np.asarray(Cp)
    dt = np.exp(log_dt)                                     # (H,)
    A = -np.exp(log_A_real) + 1j * A_imag                   # (H, NC)
    dtA = A * dt[:, None]
    dA = (1.0 + dtA / 2.0) / (1.0 - dtA / 2.0)              # (H, NC)
    Ceff = Cp * Bp[None] * (dt[:, None] / (1.0 - dtA / 2.0))[None]   # (2, H, NC)
    pows = dA[:, :, None] ** np.arange(S)[None, None, :]    # (H, NC, S)
    K = 2.0 * np.real(np.einsum('chn,hns->chs', Ceff, pows))        # (2, H, S)
    return K.astype(np.float32)


def _build_conv_matrix(K, S):
    """Toeplitz matrix equivalent to the bidirectional FFT conv. Returns (S_in, S_out, H)."""
    # TODO(synk): the backward-offset convention (dbwd = j - l - 1) mirrors the standard
    # S4 bidirectional FFT-conv padding but is not independently verified against torch.
    K_fwd, K_bwd = K[0], K[1]                                # each (H, S)
    l = np.arange(S)[:, None]
    j = np.arange(S)[None, :]
    dfwd = l - j                                             # forward (causal) offset
    dbwd = j - l - 1                                         # backward kernel offset by 1
    Kf = np.where(dfwd >= 0, K_fwd[:, np.clip(dfwd, 0, S - 1)], 0.0)   # (H, l, j)
    Kb = np.where(dbwd >= 0, K_bwd[:, np.clip(dbwd, 0, S - 1)], 0.0)   # (H, l, j)
    return np.transpose(Kf + Kb, (2, 1, 0)).astype(np.float32)         # (S_in j, S_out l, H)


def _build_fused_kmat(params, S, D):
    """Toeplitz conv matrix with the per-feature D skip folded into the diagonal."""
    K = _compute_bidir_ssm_kernel(params['log_dt'], params['log_A_real'],
                                  params['A_imag'], params['B'], params['C'], S)
    kmat = _build_conv_matrix(K, S)                          # (S_in, S_out, D) f32
    dskip = np.asarray(params['D_skip'], dtype=np.float32).reshape(D)
    kmat = kmat + np.eye(S, dtype=np.float32)[:, :, None] * dskip[None, None, :]
    return kmat                                              # (S_in, S_out, D) f32


# --------------------------------- wrapper ------------------------------------

def _pick_batch_tile(n, s, dp, target_bytes=4 << 20):
    """Largest divisor of n whose (tile, S, Dp) f32 block fits the target, with >=2 steps."""
    per_item = s * dp * 4
    nb = int(max(1, min(n, target_bytes // max(per_item, 1))))
    if n >= 2:
        nb = min(nb, max(1, n // 2))     # keep >= 2 parallel grid steps (megacore / pipeline)
    nb = max(nb, 1)
    while n % nb:
        nb -= 1
    return nb


def _pick_seq_chunk(s):
    """j-chunk size for the Toeplitz reduction axis (prefer >= 2 chunks)."""
    for cand in (32, 16, 8):
        if s % cand == 0 and s // cand >= 2:
            return cand
    return s


def s4d_wrapper_forward(params, x, input_mask, *, prenorm=False):
    N, S, D = x.shape
    assert S % 8 == 0, "sequence length must be a multiple of 8 (sublane tiling)"
    # TODO(synk): pad S to a multiple of 8 (with masked positions) to lift this restriction.
    Dp = ((D + 127) // 128) * 128                            # lane-dense feature padding

    input_mask3 = input_mask.reshape(N, S, 1).astype(x.dtype)

    # lengths = sum over sequence of the mask; S4Block converts it to a prefix mask.
    lengths = jnp.sum(input_mask3, axis=1).reshape(N)
    pmask = (jnp.arange(S)[None, :] < lengths[:, None]).astype(x.dtype).reshape(N, S, 1)

    # Host-side construction of the (S_in, S_out, D) Toeplitz matrix (D skip folded in),
    # padded to Dp lanes and stored bf16 in HBM.
    kmat = _build_fused_kmat(params, S, D)
    kmat_p = np.zeros((S, S, Dp), np.float32)
    kmat_p[:, :, :D] = kmat
    kmat_p = jnp.asarray(kmat_p).astype(jnp.bfloat16)

    x_p = jnp.pad(x, ((0, 0), (0, 0), (0, Dp - D))).astype(jnp.float32)
    lnw_p = jnp.zeros((1, Dp), jnp.float32).at[:, :D].set(params['ln_w'])
    lnb_p = jnp.zeros((1, Dp), jnp.float32).at[:, :D].set(params['ln_b'])

    # Fused GLU projection: single (Dp, 2*Dp) bf16 weight; first half -> value, second -> gate.
    w_p = jnp.zeros((Dp, 2 * Dp), jnp.float32)
    w_p = w_p.at[:D, :D].set(params['W'][0]).at[:D, Dp:Dp + D].set(params['W'][1])
    w_p = w_p.astype(jnp.bfloat16)
    b_p = jnp.zeros((1, 2 * Dp), jnp.float32)
    b_p = b_p.at[:, :D].set(params['bias'][0]).at[:, Dp:Dp + D].set(params['bias'][1])

    Nb = _pick_batch_tile(N, S, Dp)
    Sj = _pick_seq_chunk(S)
    grid = (N // Nb, S // Sj)

    # Scoped-VMEM budget: double-buffered blocks + scratch + in-kernel f32 temporaries,
    # clamped to stay inside v7x's 64 MiB while leaving pipeline headroom.
    blk_x = Nb * S * Dp * 4
    blk_out = Nb * S * Dp * 4
    blk_k = Sj * S * Dp * 2
    blk_m = Nb * Sj * 128 * 4                  # width-1 lane dim tile-pads to 128
    w_bytes = Dp * 2 * Dp * 2
    small = 8 * (2 * Dp + 2 * Dp) * 4
    acc_bytes = Nb * S * Dp * 4
    temps = 3 * Nb * S * Dp * 4 + Sj * S * Dp * 4 + Nb * S * 2 * Dp * 4
    est = 2 * (blk_x + blk_out + blk_k + blk_m + w_bytes + small) + acc_bytes + temps
    vmem_limit = int(min(56 << 20, max(int(est * 1.25) + (4 << 20), 32 << 20)))

    kernel = functools.partial(_s4d_wrapper_kernel, prenorm=prenorm, d_real=D,
                               seq_chunk=Sj)

    seq_p = pl.pallas_call(
        kernel,
        out_shape=jax.ShapeDtypeStruct((N, S, Dp), jnp.float32),
        grid_spec=pltpu.PrefetchScalarGridSpec(
            num_scalar_prefetch=0,
            grid=grid,
            in_specs=[
                pl.BlockSpec((Nb, S, Dp), lambda i, j: (i, 0, 0)),     # x (feature-padded)
                pl.BlockSpec((Nb, Sj, 1), lambda i, j: (i, j, 0)),     # prefix mask (chunked)
                pl.BlockSpec((Sj, S, Dp), lambda i, j: (j, 0, 0)),     # kmat chunk (bf16)
                pl.BlockSpec((Dp, 2 * Dp), lambda i, j: (0, 0)),       # fused GLU weight (bf16)
                pl.BlockSpec((1, 2 * Dp), lambda i, j: (0, 0)),        # fused GLU bias
                pl.BlockSpec((1, Dp), lambda i, j: (0, 0)),            # LN weight
                pl.BlockSpec((1, Dp), lambda i, j: (0, 0)),            # LN bias
            ],
            out_specs=pl.BlockSpec((Nb, S, Dp), lambda i, j: (i, 0, 0)),
            scratch_shapes=[pltpu.VMEM((Nb, S, Dp), jnp.float32)],     # conv accumulator
        ),
        compiler_params=pltpu.CompilerParams(
            dimension_semantics=("parallel", "arbitrary"),
            vmem_limit_bytes=vmem_limit),
    )(x_p, pmask, kmat_p, w_p, b_p, lnw_p, lnb_p)

    seq = seq_p[:, :, :D]
    return {'sequence': seq, 'global_state': None,
            'input_mask': input_mask3, 'aux_loss': None}


# --------------------------- pure-JAX reference -------------------------------

def _reference_forward(x, pmask, kmat_jlh, w, b, lnw, lnb, prenorm):
    def ln(v):
        mu = v.mean(-1, keepdims=True)
        var = ((v - mu) ** 2).mean(-1, keepdims=True)
        return (v - mu) / jnp.sqrt(var + 1e-5) * lnw[0] + lnb[0]

    res = x
    st = ln(x) if prenorm else x
    st = st * pmask
    y = jnp.einsum('jlh,njh->nlh', kmat_jlh, st)       # conv + D skip (fused in kmat)
    y = _gelu_tanh(y)
    z1 = jnp.einsum('nld,de->nle', y, w[0]) + b[0]
    z2 = jnp.einsum('nld,de->nle', y, w[1]) + b[1]
    out = z1 * jax.nn.sigmoid(z2)
    st = out + res
    if not prenorm:
        st = ln(st)
    return st


# ----------------------------------- main --------------------------------------

if __name__ == "__main__":
    config = {'hidden_size': 32, 'norm': 'layer', 's4_dropout': 0.1,
              'prenorm': False, 'lr': 0.004}

    N, S, D = 2, 16, config['hidden_size']
    NC = 16   # number of complex diagonal SSM modes (d_state = 2*NC)

    key = jax.random.PRNGKey(0)
    kdt, kcre, kcim, kd, kw, kb, kx = jax.random.split(key, 7)

    # Deterministic synthetic parameters matching the S4D block's structure.
    log_dt = jnp.log(1e-3) + jax.random.uniform(kdt, (D,)) * (jnp.log(1e-1) - jnp.log(1e-3))
    log_A_real = jnp.log(0.5 * jnp.ones((D, NC)))
    A_imag = jnp.tile(((2 * NC) / jnp.pi) * ((2 * NC) / (2 * jnp.arange(NC) + 1.0) - 1.0),
                      (D, 1))                                        # 'diag-inv' init
    Bp = jnp.ones((D, NC), dtype=jnp.complex64)
    Cp = (jax.random.normal(kcre, (2, D, NC)) * (0.5 ** 0.5)
          + 1j * jax.random.normal(kcim, (2, D, NC)) * (0.5 ** 0.5)).astype(jnp.complex64)
    D_skip = jax.random.normal(kd, (1, D)).astype(jnp.float32)
    bound = 1.0 / math.sqrt(D)
    W = jax.random.uniform(kw, (2, D, D), minval=-bound, maxval=bound).astype(jnp.float32)
    bias = jax.random.uniform(kb, (2, 1, D), minval=-bound, maxval=bound).astype(jnp.float32)
    ln_w = jnp.ones((1, D), jnp.float32)
    ln_b = jnp.zeros((1, D), jnp.float32)

    params = {'log_dt': log_dt, 'log_A_real': log_A_real, 'A_imag': A_imag,
              'B': Bp, 'C': Cp, 'D_skip': D_skip, 'W': W, 'bias': bias,
              'ln_w': ln_w, 'ln_b': ln_b}

    # Inputs: x (N, S, D) and a suffix-padded binary mask (N, S).
    x = jax.random.normal(kx, (N, S, D), dtype=jnp.float32)
    lengths = jnp.array([S, 11], dtype=jnp.int32)
    input_mask = (jnp.arange(S)[None, :] < lengths[:, None]).astype(jnp.float32)

    out = s4d_wrapper_forward(params, x, input_mask, prenorm=config['prenorm'])
    seq = jax.block_until_ready(out['sequence'])
    assert seq.shape == (N, S, D)

    # Cross-check against a pure-JAX reference of the same computation.  The reference
    # uses the same bf16-stored operands (kmat, GLU weight) as the kernel's HBM layout;
    # residual tolerance covers the in-kernel bf16 activation cast and the approx-
    # reciprocal sigmoid.
    kmat_fused = _build_fused_kmat(params, S, D)
    kmat_q = jnp.asarray(kmat_fused).astype(jnp.bfloat16).astype(jnp.float32)
    w_q = W.astype(jnp.bfloat16).astype(jnp.float32)
    pmask = (jnp.arange(S)[None, :] < jnp.sum(input_mask, axis=1)[:, None]
             ).astype(jnp.float32).reshape(N, S, 1)
    ref = _reference_forward(x, pmask, kmat_q, w_q, bias, ln_w, ln_b,
                             config['prenorm'])
    np.testing.assert_allclose(np.asarray(seq), np.asarray(ref), rtol=2e-2, atol=2e-2)

    print("KERNEL_OK")
</pallas_src>

<mosaic_0001>
module attributes {stable_mosaic.version = 11 : i64} {
  func.func @_s4d_wrapper_kernel(%arg0: i32, %arg1: i32, %arg2: memref<1x16x128xf32, #tpu.memory_space<vmem>>, %arg3: memref<1x8x1xf32, #tpu.memory_space<vmem>>, %arg4: memref<8x16x128xbf16, #tpu.memory_space<vmem>>, %arg5: memref<128x256xbf16, #tpu.memory_space<vmem>>, %arg6: memref<1x256xf32, #tpu.memory_space<vmem>>, %arg7: memref<1x128xf32, #tpu.memory_space<vmem>>, %arg8: memref<1x128xf32, #tpu.memory_space<vmem>>, %arg9: memref<1x16x128xf32, #tpu.memory_space<vmem>>, %arg10: memref<1x16x128xf32, #tpu.memory_space<vmem>>) attributes {dimension_semantics = [#tpu.dimension_semantics<parallel>, #tpu.dimension_semantics<arbitrary>], iteration_bounds = array<i64: 2, 2>, scalar_prefetch = 0 : i64, scratch_operands = 1 : i64, tpu.core_type = #tpu.core_type<tc>, window_params = [{transform_indices = @transform_0, window_bounds = array<i64: 1, 16, 128>}, {transform_indices = @transform_1, window_bounds = array<i64: 1, 8, 1>}, {transform_indices = @transform_2, window_bounds = array<i64: 8, 16, 128>}, {pipeline_mode = #tpu.pipeline_mode<synchronous>, transform_indices = @transform_3, window_bounds = array<i64: 128, 256>}, {pipeline_mode = #tpu.pipeline_mode<synchronous>, transform_indices = @transform_4, window_bounds = array<i64: 1, 256>}, {pipeline_mode = #tpu.pipeline_mode<synchronous>, transform_indices = @transform_5, window_bounds = array<i64: 1, 128>}, {pipeline_mode = #tpu.pipeline_mode<synchronous>, transform_indices = @transform_6, window_bounds = array<i64: 1, 128>}, {transform_indices = @transform_7, window_bounds = array<i64: 1, 16, 128>}]} {
    %c0 = arith.constant 0 : index
    %c0_0 = arith.constant 0 : index
    %0 = vector.load %arg7[%c0, %c0_0] : memref<1x128xf32, #tpu.memory_space<vmem>>, vector<1x128xf32>
    %c0_1 = arith.constant 0 : index
    %c0_2 = arith.constant 0 : index
    %1 = vector.load %arg8[%c0_1, %c0_2] : memref<1x128xf32, #tpu.memory_space<vmem>>, vector<1x128xf32>
    %c0_i32 = arith.constant 0 : i32
    %2 = arith.cmpi eq, %arg1, %c0_i32 : i32
    %3 = arith.extui %2 : i1 to i32
    %c0_i32_3 = arith.constant 0 : i32
    %4 = arith.cmpi ne, %3, %c0_i32_3 : i32
    scf.if %4 {
      %cst = arith.constant 0.000000e+00 : f32
      %75 = vector.broadcast %cst : f32 to vector<1x16x128xf32>
      %c0_19 = arith.constant 0 : index
      %c0_20 = arith.constant 0 : index
      %c0_21 = arith.constant 0 : index
      %76 = vector.load %arg10[%c0_19, %c0_20, %c0_21] : memref<1x16x128xf32, #tpu.memory_space<vmem>>, vector<1x16x128xf32>
      tpu.vector_store %arg10[%c0_19, %c0_20, %c0_21], %75 {strides = array<i32>} : memref<1x16x128xf32, #tpu.memory_space<vmem>>, vector<1x16x128xf32>,
    } else {
    }
    %c8_i32 = arith.constant 8 : i32
    %5 = arith.muli %arg1, %c8_i32 : i32
    %6 = tpu.assume_multiple %5, 8 : i32
    %c0_4 = arith.constant 0 : index
    %7 = arith.index_cast %6 : i32 to index
    %c0_5 = arith.constant 0 : index
    %8 = vector.load %arg2[%c0_4, %7, %c0_5] : memref<1x16x128xf32, #tpu.memory_space<vmem>>, vector<1x8x128xf32>
    %c0_6 = arith.constant 0 : index
    %c0_7 = arith.constant 0 : index
    %c0_8 = arith.constant 0 : index
    %9 = vector.load %arg3[%c0_6, %c0_7, %c0_8] : memref<1x8x1xf32, #tpu.memory_space<vmem>>, vector<1x8x1xf32>
    %10 = vector.broadcast %9 : vector<1x8x1xf32> to vector<1x8x128xf32>
    %11 = arith.mulf %8, %10 : vector<1x8x128xf32>
    %c0_9 = arith.constant 0 : index
    %c0_10 = arith.constant 0 : index
    %c0_11 = arith.constant 0 : index
    %12 = vector.load %arg4[%c0_9, %c0_10, %c0_11] : memref<8x16x128xbf16, #tpu.memory_space<vmem>>, vector<8x16x128xbf16>
    %13 = arith.extf %12 : vector<8x16x128xbf16> to vector<8x16x128xf32>
    %14 = vector.extract_strided_slice %13 {offsets = [0, 0, 0], sizes = [1, 16, 128], strides = [1, 1, 1]} : vector<8x16x128xf32> to vector<1x16x128xf32>
    %15 = vector.shape_cast %14 : vector<1x16x128xf32> to vector<16x128xf32>
    %16 = vector.shape_cast %15 : vector<16x128xf32> to vector<1x16x128xf32>
    %17 = vector.extract_strided_slice %11 {offsets = [0, 0, 0], sizes = [1, 1, 128], strides = [1, 1, 1]} : vector<1x8x128xf32> to vector<1x1x128xf32>
    %18 = vector.broadcast %17 : vector<1x1x128xf32> to vector<1x16x128xf32>
    %19 = arith.mulf %16, %18 : vector<1x16x128xf32>
    %20 = vector.extract_strided_slice %13 {offsets = [1, 0, 0], sizes = [1, 16, 128], strides = [1, 1, 1]} : vector<8x16x128xf32> to vector<1x16x128xf32>
    %21 = vector.shape_cast %20 : vector<1x16x128xf32> to vector<16x128xf32>
    %22 = vector.shape_cast %21 : vector<16x128xf32> to vector<1x16x128xf32>
    %23 = vector.extract_strided_slice %11 {offsets = [0, 1, 0], sizes = [1, 1, 128], strides = [1, 1, 1]} : vector<1x8x128xf32> to vector<1x1x128xf32>
    %24 = vector.broadcast %23 : vector<1x1x128xf32> to vector<1x16x128xf32>
    %25 = arith.mulf %22, %24 : vector<1x16x128xf32>
    %26 = arith.addf %19, %25 : vector<1x16x128xf32>
    %27 = vector.extract_strided_slice %13 {offsets = [2, 0, 0], sizes = [1, 16, 128], strides = [1, 1, 1]} : vector<8x16x128xf32> to vector<1x16x128xf32>
    %28 = vector.shape_cast %27 : vector<1x16x128xf32> to vector<16x128xf32>
    %29 = vector.shape_cast %28 : vector<16x128xf32> to vector<1x16x128xf32>
    %30 = vector.extract_strided_slice %11 {offsets = [0, 2, 0], sizes = [1, 1, 128], strides = [1, 1, 1]} : vector<1x8x128xf32> to vector<1x1x128xf32>
    %31 = vector.broadcast %30 : vector<1x1x128xf32> to vector<1x16x128xf32>
    %32 = arith.mulf %29, %31 : vector<1x16x128xf32>
    %33 = arith.addf %26, %32 : vector<1x16x128xf32>
    %34 = vector.extract_strided_slice %13 {offsets = [3, 0, 0], sizes = [1, 16, 128], strides = [1, 1, 1]} : vector<8x16x128xf32> to vector<1x16x128xf32>
    %35 = vector.shape_cast %34 : vector<1x16x128xf32> to vector<16x128xf32>
    %36 = vector.shape_cast %35 : vector<16x128xf32> to vector<1x16x128xf32>
    %37 = vector.extract_strided_slice %11 {offsets = [0, 3, 0], sizes = [1, 1, 128], strides = [1, 1, 1]} : vector<1x8x128xf32> to vector<1x1x128xf32>
    %38 = vector.broadcast %37 : vector<1x1x128xf32> to vector<1x16x128xf32>
    %39 = arith.mulf %36, %38 : vector<1x16x128xf32>
    %40 = arith.addf %33, %39 : vector<1x16x128xf32>
    %41 = vector.extract_strided_slice %13 {offsets = [4, 0, 0], sizes = [1, 16, 128], strides = [1, 1, 1]} : vector<8x16x128xf32> to vector<1x16x128xf32>
    %42 = vector.shape_cast %41 : vector<1x16x128xf32> to vector<16x128xf32>
    %43 = vector.shape_cast %42 : vector<16x128xf32> to vector<1x16x128xf32>
    %44 = vector.extract_strided_slice %11 {offsets = [0, 4, 0], sizes = [1, 1, 128], strides = [1, 1, 1]} : vector<1x8x128xf32> to vector<1x1x128xf32>
    %45 = vector.broadcast %44 : vector<1x1x128xf32> to vector<1x16x128xf32>
    %46 = arith.mulf %43, %45 : vector<1x16x128xf32>
    %47 = arith.addf %40, %46 : vector<1x16x128xf32>
    %48 = vector.extract_strided_slice %13 {offsets = [5, 0, 0], sizes = [1, 16, 128], strides = [1, 1, 1]} : vector<8x16x128xf32> to vector<1x16x128xf32>
    %49 = vector.shape_cast %48 : vector<1x16x128xf32> to vector<16x128xf32>
    %50 = vector.shape_cast %49 : vector<16x128xf32> to vector<1x16x128xf32>
    %51 = vector.extract_strided_slice %11 {offsets = [0, 5, 0], sizes = [1, 1, 128], strides = [1, 1, 1]} : vector<1x8x128xf32> to vector<1x1x128xf32>
    %52 = vector.broadcast %51 : vector<1x1x128xf32> to vector<1x16x128xf32>
    %53 = arith.mulf %50, %52 : vector<1x16x128xf32>
    %54 = arith.addf %47, %53 : vector<1x16x128xf32>
    %55 = vector.extract_strided_slice %13 {offsets = [6, 0, 0], sizes = [1, 16, 128], strides = [1, 1, 1]} : vector<8x16x128xf32> to vector<1x16x128xf32>
    %56 = vector.shape_cast %55 : vector<1x16x128xf32> to vector<16x128xf32>
    %57 = vector.shape_cast %56 : vector<16x128xf32> to vector<1x16x128xf32>
    %58 = vector.extract_strided_slice %11 {offsets = [0, 6, 0], sizes = [1, 1, 128], strides = [1, 1, 1]} : vector<1x8x128xf32> to vector<1x1x128xf32>
    %59 = vector.broadcast %58 : vector<1x1x128xf32> to vector<1x16x128xf32>
    %60 = arith.mulf %57, %59 : vector<1x16x128xf32>
    %61 = arith.addf %54, %60 : vector<1x16x128xf32>
    %62 = vector.extract_strided_slice %13 {offsets = [7, 0, 0], sizes = [1, 16, 128], strides = [1, 1, 1]} : vector<8x16x128xf32> to vector<1x16x128xf32>
    %63 = vector.shape_cast %62 : vector<1x16x128xf32> to vector<16x128xf32>
    %64 = vector.shape_cast %63 : vector<16x128xf32> to vector<1x16x128xf32>
    %65 = vector.extract_strided_slice %11 {offsets = [0, 7, 0], sizes = [1, 1, 128], strides = [1, 1, 1]} : vector<1x8x128xf32> to vector<1x1x128xf32>
    %66 = vector.broadcast %65 : vector<1x1x128xf32> to vector<1x16x128xf32>
    %67 = arith.mulf %64, %66 : vector<1x16x128xf32>
    %68 = arith.addf %61, %67 : vector<1x16x128xf32>
    %c0_12 = arith.constant 0 : index
    %c0_13 = arith.constant 0 : index
    %c0_14 = arith.constant 0 : index
    %69 = vector.load %arg10[%c0_12, %c0_13, %c0_14] : memref<1x16x128xf32, #tpu.memory_space<vmem>>, vector<1x16x128xf32>
    %70 = arith.addf %69, %68 : vector<1x16x128xf32>
    %c0_15 = arith.constant 0 : index
    %c0_16 = arith.constant 0 : index
    %c0_17 = arith.constant 0 : index
    %71 = vector.load %arg10[%c0_15, %c0_16, %c0_17] : memref<1x16x128xf32, #tpu.memory_space<vmem>>, vector<1x16x128xf32>
    tpu.vector_store %arg10[%c0_15, %c0_16, %c0_17], %70 {strides = array<i32>} : memref<1x16x128xf32, #tpu.memory_space<vmem>>, vector<1x16x128xf32>,
    %c1_i32 = arith.constant 1 : i32
    %72 = arith.cmpi eq, %arg1, %c1_i32 : i32
    %73 = arith.extui %72 : i1 to i32
    %c0_i32_18 = arith.constant 0 : i32
    %74 = arith.cmpi ne, %73, %c0_i32_18 : i32
    scf.if %74 {
      %c0_19 = arith.constant 0 : index
      %c0_20 = arith.constant 0 : index
      %c0_21 = arith.constant 0 : index
      %75 = vector.load %arg10[%c0_19, %c0_20, %c0_21] : memref<1x16x128xf32, #tpu.memory_space<vmem>>, vector<1x16x128xf32>
      %cst = arith.constant 5.000000e-01 : f32
      %76 = vector.broadcast %cst : f32 to vector<1x16x128xf32>
      %77 = arith.mulf %76, %75 : vector<1x16x128xf32>
      %cst_22 = arith.constant 4.471500e-02 : f32
      %78 = vector.broadcast %cst_22 : f32 to vector<1x16x128xf32>
      %79 = arith.mulf %78, %75 : vector<1x16x128xf32>
      %80 = arith.mulf %79, %75 : vector<1x16x128xf32>
      %81 = arith.mulf %80, %75 : vector<1x16x128xf32>
      %82 = arith.addf %75, %81 : vector<1x16x128xf32>
      %cst_23 = arith.constant 0.797884583 : f32
      %83 = vector.broadcast %cst_23 : f32 to vector<1x16x128xf32>
      %84 = arith.mulf %83, %82 : vector<1x16x128xf32>
      %85 = math.tanh %84 : vector<1x16x128xf32>
      %cst_24 = arith.constant 1.000000e+00 : f32
      %86 = vector.broadcast %cst_24 : f32 to vector<1x16x128xf32>
      %87 = arith.addf %86, %85 : vector<1x16x128xf32>
      %88 = arith.mulf %77, %87 : vector<1x16x128xf32>
      %89 = vector.shape_cast %88 : vector<1x16x128xf32> to vector<16x128xf32>
      %90 = arith.truncf %89 : vector<16x128xf32> to vector<16x128xbf16>
      %c0_25 = arith.constant 0 : index
      %c0_26 = arith.constant 0 : index
      %91 = vector.load %arg5[%c0_25, %c0_26] : memref<128x256xbf16, #tpu.memory_space<vmem>>, vector<128x256xbf16>
      %cst_27 = arith.constant dense<0.000000e+00> : vector<16x256xf32>
      %92 = tpu.matmul %90, %91, %cst_27 {dimension_numbers = #tpu.dot_dimension_numbers<[1], [0], [0], [1], [0, 0, 1, 1], [], []>} : vector<16x128xbf16>, vector<128x256xbf16>, vector<16x256xf32> -> vector<16x256xf32>
      %c0_28 = arith.constant 0 : index
      %c0_29 = arith.constant 0 : index
      %93 = vector.load %arg6[%c0_28, %c0_29] : memref<1x256xf32, #tpu.memory_space<vmem>>, vector<1x256xf32>
      %94 = vector.broadcast %93 : vector<1x256xf32> to vector<16x256xf32>
      %95 = arith.addf %92, %94 : vector<16x256xf32>
      %96 = vector.extract_strided_slice %95 {offsets = [0, 0], sizes = [16, 128], strides = [1, 1]} : vector<16x256xf32> to vector<16x128xf32>
      %97 = vector.extract_strided_slice %95 {offsets = [0, 128], sizes = [16, 128], strides = [1, 1]} : vector<16x256xf32> to vector<16x128xf32>
      %cst_30 = arith.constant 0.000000e+00 : f32
      %98 = vector.broadcast %cst_30 : f32 to vector<16x128xf32>
      %99 = arith.subf %98, %97 : vector<16x128xf32>
      %100 = math.exp %99 : vector<16x128xf32>
      %cst_31 = arith.constant 1.000000e+00 : f32
      %101 = vector.broadcast %cst_31 : f32 to vector<16x128xf32>
      %102 = arith.addf %101, %100 : vector<16x128xf32>
      %103 = tpu.reciprocal %102 {approx = true} : vector<16x128xf32> -> vector<16x128xf32>
      %104 = arith.mulf %96, %103 : vector<16x128xf32>
      %105 = vector.shape_cast %104 : vector<16x128xf32> to vector<1x16x128xf32>
      %c0_32 = arith.constant 0 : index
      %c0_33 = arith.constant 0 : index
      %c0_34 = arith.constant 0 : index
      %106 = vector.load %arg2[%c0_32, %c0_33, %c0_34] : memref<1x16x128xf32, #tpu.memory_space<vmem>>, vector<1x16x128xf32>
      %107 = arith.addf %105, %106 : vector<1x16x128xf32>
      %cst_35 = arith.constant dense<0.000000e+00> : vector<1x16xf32>
      %108 = vector.multi_reduction <add>, %107, %cst_35 [2] : vector<1x16x128xf32> to vector<1x16xf32>
      %109 = vector.shape_cast %108 : vector<1x16xf32> to vector<1x16x1xf32>
      %cst_36 = arith.constant 3.125000e-02 : f32
      %110 = vector.broadcast %cst_36 : f32 to vector<1x16x1xf32>
      %111 = arith.mulf %109, %110 : vector<1x16x1xf32>
      %112 = tpu.iota {dimensions = array<i32: 2>} : vector<1x16x128xi32>
      %c32_i32 = arith.constant 32 : i32
      %113 = vector.broadcast %c32_i32 : i32 to vector<1x16x128xi32>
      %114 = arith.cmpi slt, %112, %113 : vector<1x16x128xi32>
      %115 = vector.broadcast %111 : vector<1x16x1xf32> to vector<1x16x128xf32>
      %116 = arith.subf %107, %115 : vector<1x16x128xf32>
      %cst_37 = arith.constant 0.000000e+00 : f32
      %117 = vector.broadcast %cst_37 : f32 to vector<1x16x128xf32>
      %118 = arith.select %114, %116, %117 : vector<1x16x128xi1>, vector<1x16x128xf32>
      %119 = arith.mulf %118, %118 : vector<1x16x128xf32>
      %cst_38 = arith.constant dense<0.000000e+00> : vector<1x16xf32>
      %120 = vector.multi_reduction <add>, %119, %cst_38 [2] : vector<1x16x128xf32> to vector<1x16xf32>
      %121 = vector.shape_cast %120 : vector<1x16xf32> to vector<1x16x1xf32>
      %cst_39 = arith.constant 3.125000e-02 : f32
      %122 = vector.broadcast %cst_39 : f32 to vector<1x16x1xf32>
      %123 = arith.mulf %121, %122 : vector<1x16x1xf32>
      %cst_40 = arith.constant 9.99999974E-6 : f32
      %124 = vector.broadcast %cst_40 : f32 to vector<1x16x1xf32>
      %125 = arith.addf %123, %124 : vector<1x16x1xf32>
      %126 = math.rsqrt %125 : vector<1x16x1xf32>
      %127 = vector.broadcast %126 : vector<1x16x1xf32> to vector<1x16x128xf32>
      %128 = arith.mulf %118, %127 : vector<1x16x128xf32>
      %129 = vector.shape_cast %0 : vector<1x128xf32> to vector<1x1x128xf32>
      %130 = vector.broadcast %129 : vector<1x1x128xf32> to vector<1x16x128xf32>
      %131 = arith.mulf %128, %130 : vector<1x16x128xf32>
      %132 = vector.shape_cast %1 : vector<1x128xf32> to vector<1x1x128xf32>
      %133 = vector.broadcast %132 : vector<1x1x128xf32> to vector<1x16x128xf32>
      %134 = arith.addf %131, %133 : vector<1x16x128xf32>
      %c0_41 = arith.constant 0 : index
      %c0_42 = arith.constant 0 : index
      %c0_43 = arith.constant 0 : index
      %135 = vector.load %arg9[%c0_41, %c0_42, %c0_43] : memref<1x16x128xf32, #tpu.memory_space<vmem>>, vector<1x16x128xf32>
      tpu.vector_store %arg9[%c0_41, %c0_42, %c0_43], %134 {strides = array<i32>} : memref<1x16x128xf32, #tpu.memory_space<vmem>>, vector<1x16x128xf32>,
    } else {
    }
    return
  }
  func.func @transform_0(%arg0: i32, %arg1: i32) -> (i32, i32, i32) {
    %c0_i32 = arith.constant 0 : i32
    %c0_i32_0 = arith.constant 0 : i32
    %c0_i32_1 = arith.constant 0 : i32
    return %arg0, %c0_i32, %c0_i32_0 : i32, i32, i32
  }
  func.func @transform_1(%arg0: i32, %arg1: i32) -> (i32, i32, i32) {
    %c0_i32 = arith.constant 0 : i32
    %c0_i32_0 = arith.constant 0 : i32
    return %arg0, %arg1, %c0_i32 : i32, i32, i32
  }
  func.func @transform_2(%arg0: i32, %arg1: i32) -> (i32, i32, i32) {
    %c0_i32 = arith.constant 0 : i32
    %c0_i32_0 = arith.constant 0 : i32
    %c0_i32_1 = arith.constant 0 : i32
    return %arg1, %c0_i32, %c0_i32_0 : i32, i32, i32
  }
  func.func @transform_3(%arg0: i32, %arg1: i32) -> (i32, i32) {
    %c0_i32 = arith.constant 0 : i32
    %c0_i32_0 = arith.constant 0 : i32
    %c0_i32_1 = arith.constant 0 : i32
    return %c0_i32, %c0_i32_0 : i32, i32
  }
  func.func @transform_4(%arg0: i32, %arg1: i32) -> (i32, i32) {
    %c0_i32 = arith.constant 0 : i32
    %c0_i32_0 = arith.constant 0 : i32
    %c0_i32_1 = arith.constant 0 : i32
    return %c0_i32, %c0_i32_0 : i32, i32
  }
  func.func @transform_5(%arg0: i32, %arg1: i32) -> (i32, i32) {
    %c0_i32 = arith.constant 0 : i32
    %c0_i32_0 = arith.constant 0 : i32
    %c0_i32_1 = arith.constant 0 : i32
    return %c0_i32, %c0_i32_0 : i32, i32
  }
  func.func @transform_6(%arg0: i32, %arg1: i32) -> (i32, i32) {
    %c0_i32 = arith.constant 0 : i32
    %c0_i32_0 = arith.constant 0 : i32
    %c0_i32_1 = arith.constant 0 : i32
    return %c0_i32, %c0_i32_0 : i32, i32
  }
  func.func @transform_7(%arg0: i32, %arg1: i32) -> (i32, i32, i32) {
    %c0_i32 = arith.constant 0 : i32
    %c0_i32_0 = arith.constant 0 : i32
    %c0_i32_1 = arith.constant 0 : i32
    return %arg0, %c0_i32, %c0_i32_0 : i32, i32, i32
  }
}

</mosaic_0001>

<llo_original>
// kernel: tpu_custom_call.1
$region0: #{tpu_custom_call.1}
  #allocation0 [shape = 'u32[]', space=smem, size = 0x4, offset = 0x4, fixed_abs, tag = 'smem constant byte address 0x4 - core index']
  #allocation1 [shape = 'u32[144,128]{1,0:T(1,128)}', space=vmem, size = 0x12000, scoped, tag = 'internal scratch']
  #allocation2 [shape = 'f32[1,16,128]{2,1,0:T(8,128)}', space=vmem, size = 0x2000, scoped, tag = 'scratch operand']
  %s0 = inlined_call_operand.vmem [shape: f32[2,16,128], index: 0, kind: input, shape index: {}]
  %s1 = inlined_call_operand.vmem [shape: f32[2,16,1], index: 1, kind: input, shape index: {}]
  %s2 = inlined_call_operand.hbm [shape: bf16[16,16,128], index: 2, kind: input, shape index: {}]
  %s3 = inlined_call_operand.hbm [shape: bf16[128,256], index: 3, kind: input, shape index: {}]
  %s4 = inlined_call_operand.vmem [shape: f32[1,256], index: 4, kind: input, shape index: {}]
  %s5 = inlined_call_operand.vmem [shape: f32[1,128], index: 5, kind: input, shape index: {}]
  %s6 = inlined_call_operand.vmem [shape: f32[1,128], index: 6, kind: input, shape index: {}]
  %s7 = inlined_call_operand.hbm [shape: f32[2,16,128], index: 7, kind: output, shape index: {}]
  %s8 = sld [smem:[#allocation0]]
  $region77: #{tpu_custom_call.1} parent=0
    _
  %s10 = ssub.s32 1, %s8
  %s11 = scalar_select 0, %s10, %s8
  $region1: #{tpu_custom_call.1} parent=0
    #allocation3 [shape = 'u8[65536]{0}', space=vmem, size = 0x10000, scoped, tag = 'input window, operand 2']
    #allocation4 [shape = 's32[2]{0}', space=sflag, size = 0x8, scoped, tag = 'scoped memory for tpu_custom_call.1']
    #allocation5 [shape = 's32[2]{0}', space=sflag, size = 0x8, scoped, tag = 'scoped memory for tpu_custom_call.1']
    #allocation6 [shape = 'u8[65536]{0}', space=vmem, size = 0x10000, scoped, tag = 'input window, operand 3, single buffered']
    #allocation7 [shape = 's32[1]{0}', space=sflag, size = 0x4, scoped, tag = 'scoped memory for tpu_custom_call.1']
    #allocation8 [shape = 'u8[16384]{0}', space=vmem, size = 0x4000, scoped, tag = 'output window, operand 0']
    %12 = vsyncpa [#allocation4], 0
    %s13 = scalar_lea.sflag [#allocation4], 1
    %14 = vsyncpa %s13, 0
    %15 = vsyncpa [#allocation7], 0
    %16 = vsyncpa [#allocation5], 0
    %s17 = scalar_lea.sflag [#allocation5], 1
    %18 = vsyncpa %s17, 0
    loop: start=0, step=1, limit=6
    $region2: #{tpu_custom_call.1} parent=1 // loop_pre_header
      _
    $region3: #{tpu_custom_call.1} parent=1 // loop_header
      %s20 = sphi 0, %s24
      %p21 = scmp.ge.s32.totalorder %s20, 6
      %s27 = sphi 0, %s39
      %s28 = sphi 0, %s35
      %s29 = sphi 0, %s27
      %s30 = sphi 0, %s28
      %s31 = sphi 0, %s29
      %s32 = sphi 0, %s30
      %s42 = sphi 0, %s44
      %s45 = sphi 0, %s42
      %s46 = sphi 0, %s45
      %s62 = sphi 0, %s46
      %s70 = sphi 0, %s72
      %s73 = sphi 0, %s70
      %s74 = sphi 0, %s73
      %s90 = sphi 0, %s74
      %s96 = sphi 0, %s98
      %s99 = sphi 0, %s96
      %s100 = sphi 0, %s99
      %s116 = sphi 0, %s100
      %s120 = sphi 0, %s120
      %s122 = sphi 0, %s120
      %s123 = sphi 0, %s122
      %s137 = sphi 0, %s123
      %s141 = sphi 0, %s141
      %s143 = sphi 0, %s141
      %s144 = sphi 0, %s143
      %s158 = sphi 0, %s144
      %s162 = sphi 0, %s162
      %s164 = sphi 0, %s162
      %s165 = sphi 0, %s164
      %s179 = sphi 0, %s165
      %s183 = sphi 0, %s183
      %s185 = sphi 0, %s183
      %s186 = sphi 0, %s185
      %s200 = sphi 0, %s186
      %s206 = sphi 0, %s208
      %s209 = sphi 0, %s206
      %s210 = sphi 0, %s209
      %s226 = sphi 0, %s210
    $region4: #{tpu_custom_call.1} parent=1 // loop_header_branch
      %23 = sbr.rel (%p21) target = $region8
    $region5: #{tpu_custom_call.1} parent=1 // loop_body
      %s25 = ssub.s32 %s20, 1
      %s26 = ssub.s32 %s20, 2
      %s33 = sadd.s32 1, %s28
      %p34 = scmp.ge.s32.totalorder %s33, 2
      %s35 = scalar_select %p34, 0, %s33
      %s36 = sadd.s32 1, %s27
      %s37 = scalar_select %p34, %s36, %s27
      %p38 = scmp.ge.s32.totalorder %s37, 2
      %s39 = scalar_select %p38, 0, %s37
      %s40 = ssub.s32 %s27, %s39
      %p41 = scmp.eq.s32.totalorder %s40, 0
      %s43 = sadd.s32 %s42, 1
      %s44 = scalar_select %p41, %s42, %s43
      %p47 = pneg %p41
      %p48 = scmp.eq.s32.totalorder %s20, 3
      %p49 = por %p47, %p48
      %p50 = scmp.ne.s32.totalorder %s42, %s45
      %p51 = scmp.eq.s32.totalorder %s20, 0
      %p52 = por %p50, %p51
      %p53 = scmp.ne.s32.totalorder %s42, %s45
      %p54 = scmp.eq.s32.totalorder %s25, 3
      %p55 = por %p53, %p54
      %p56 = scmp.ne.s32.totalorder %s45, %s46
      %p57 = scmp.eq.s32.totalorder %s25, 0
      %p58 = por %p56, %p57
      %p59 = scmp.ne.s32.totalorder %s45, %s46
      %p60 = scmp.eq.s32.totalorder %s26, 3
      %p61 = por %p59, %p60
      %p63 = scmp.ne.s32.totalorder %s46, %s62
      %p64 = scmp.eq.s32.totalorder %s26, 0
      %p65 = por %p63, %p64
      %s66 = ssub.s32 %s27, %s39
      %s67 = ssub.s32 %s28, %s35
      %s68 = sor.u32 %s66, %s67
      %p69 = scmp.eq.s32.totalorder %s68, 0
      %s71 = sadd.s32 %s70, 1
      %s72 = scalar_select %p69, %s70, %s71
      %p75 = pneg %p69
      %p76 = scmp.eq.s32.totalorder %s20, 3
      %p77 = por %p75, %p76
      %p78 = scmp.ne.s32.totalorder %s70, %s73
      %p79 = scmp.eq.s32.totalorder %s20, 0
      %p80 = por %p78, %p79
      %p81 = scmp.ne.s32.totalorder %s70, %s73
      %p82 = scmp.eq.s32.totalorder %s25, 3
      %p83 = por %p81, %p82
      %p84 = scmp.ne.s32.totalorder %s73, %s74
      %p85 = scmp.eq.s32.totalorder %s25, 0
      %p86 = por %p84, %p85
      %p87 = scmp.ne.s32.totalorder %s73, %s74
      %p88 = scmp.eq.s32.totalorder %s26, 3
      %p89 = por %p87, %p88
      %p91 = scmp.ne.s32.totalorder %s74, %s90
      %p92 = scmp.eq.s32.totalorder %s26, 0
      %p93 = por %p91, %p92
      %s94 = ssub.s32 %s28, %s35
      %p95 = scmp.eq.s32.totalorder %s94, 0
      %s97 = sadd.s32 %s96, 1
      %s98 = scalar_select %p95, %s96, %s97
      %p101 = pneg %p95
      %p102 = scmp.eq.s32.totalorder %s20, 3
      %p103 = por %p101, %p102
      %p104 = scmp.ne.s32.totalorder %s96, %s99
      %p105 = scmp.eq.s32.totalorder %s20, 0
      %p106 = por %p104, %p105
      %p107 = scmp.ne.s32.totalorder %s96, %s99
      %p108 = scmp.eq.s32.totalorder %s25, 3
      %p109 = por %p107, %p108
      %p110 = scmp.ne.s32.totalorder %s99, %s100
      %p111 = scmp.eq.s32.totalorder %s25, 0
      %p112 = por %p110, %p111
      %p113 = scmp.ne.s32.totalorder %s99, %s100
      %p114 = scmp.eq.s32.totalorder %s26, 3
      %p115 = por %p113, %p114
      %p117 = scmp.ne.s32.totalorder %s100, %s116
      %p118 = scmp.eq.s32.totalorder %s26, 0
      %p119 = por %p117, %p118
      %s121 = sadd.s32 %s120, 1
      %p124 = scmp.eq.s32.totalorder %s20, 3
      %p125 = scmp.ne.s32.totalorder %s120, %s122
      %p126 = scmp.eq.s32.totalorder %s20, 0
      %p127 = por %p125, %p126
      %p128 = scmp.ne.s32.totalorder %s120, %s122
      %p129 = scmp.eq.s32.totalorder %s25, 3
      %p130 = por %p128, %p129
      %p131 = scmp.ne.s32.totalorder %s122, %s123
      %p132 = scmp.eq.s32.totalorder %s25, 0
      %p133 = por %p131, %p132
      %p134 = scmp.ne.s32.totalorder %s122, %s123
      %p135 = scmp.eq.s32.totalorder %s26, 3
      %p136 = por %p134, %p135
      %p138 = scmp.ne.s32.totalorder %s123, %s137
      %p139 = scmp.eq.s32.totalorder %s26, 0
      %p140 = por %p138, %p139
      %s142 = sadd.s32 %s141, 1
      %p145 = scmp.eq.s32.totalorder %s20, 3
      %p146 = scmp.ne.s32.totalorder %s141, %s143
      %p147 = scmp.eq.s32.totalorder %s20, 0
      %p148 = por %p146, %p147
      %p149 = scmp.ne.s32.totalorder %s141, %s143
      %p150 = scmp.eq.s32.totalorder %s25, 3
      %p151 = por %p149, %p150
      %p152 = scmp.ne.s32.totalorder %s143, %s144
      %p153 = scmp.eq.s32.totalorder %s25, 0
      %p154 = por %p152, %p153
      %p155 = scmp.ne.s32.totalorder %s143, %s144
      %p156 = scmp.eq.s32.totalorder %s26, 3
      %p157 = por %p155, %p156
      %p159 = scmp.ne.s32.totalorder %s144, %s158
      %p160 = scmp.eq.s32.totalorder %s26, 0
      %p161 = por %p159, %p160
      %s163 = sadd.s32 %s162, 1
      %p166 = scmp.eq.s32.totalorder %s20, 3
      %p167 = scmp.ne.s32.totalorder %s162, %s164
      %p168 = scmp.eq.s32.totalorder %s20, 0
      %p169 = por %p167, %p168
      %p170 = scmp.ne.s32.totalorder %s162, %s164
      %p171 = scmp.eq.s32.totalorder %s25, 3
      %p172 = por %p170, %p171
      %p173 = scmp.ne.s32.totalorder %s164, %s165
      %p174 = scmp.eq.s32.totalorder %s25, 0
      %p175 = por %p173, %p174
      %p176 = scmp.ne.s32.totalorder %s164, %s165
      %p177 = scmp.eq.s32.totalorder %s26, 3
      %p178 = por %p176, %p177
      %p180 = scmp.ne.s32.totalorder %s165, %s179
      %p181 = scmp.eq.s32.totalorder %s26, 0
      %p182 = por %p180, %p181
      %s184 = sadd.s32 %s183, 1
      %p187 = scmp.eq.s32.totalorder %s20, 3
      %p188 = scmp.ne.s32.totalorder %s183, %s185
      %p189 = scmp.eq.s32.totalorder %s20, 0
      %p190 = por %p188, %p189
      %p191 = scmp.ne.s32.totalorder %s183, %s185
      %p192 = scmp.eq.s32.totalorder %s25, 3
      %p193 = por %p191, %p192
      %p194 = scmp.ne.s32.totalorder %s185, %s186
      %p195 = scmp.eq.s32.totalorder %s25, 0
      %p196 = por %p194, %p195
      %p197 = scmp.ne.s32.totalorder %s185, %s186
      %p198 = scmp.eq.s32.totalorder %s26, 3
      %p199 = por %p197, %p198
      %p201 = scmp.ne.s32.totalorder %s186, %s200
      %p202 = scmp.eq.s32.totalorder %s26, 0
      %p203 = por %p201, %p202
      %s204 = ssub.s32 %s27, %s39
      %p205 = scmp.eq.s32.totalorder %s204, 0
      %s207 = sadd.s32 %s206, 1
      %s208 = scalar_select %p205, %s206, %s207
      %p211 = pneg %p205
      %p212 = scmp.eq.s32.totalorder %s20, 3
      %p213 = por %p211, %p212
      %p214 = scmp.ne.s32.totalorder %s206, %s209
      %p215 = scmp.eq.s32.totalorder %s20, 0
      %p216 = por %p214, %p215
      %p217 = scmp.ne.s32.totalorder %s206, %s209
      %p218 = scmp.eq.s32.totalorder %s25, 3
      %p219 = por %p217, %p218
      %p220 = scmp.ne.s32.totalorder %s209, %s210
      %p221 = scmp.eq.s32.totalorder %s25, 0
      %p222 = por %p220, %p221
      %p223 = scmp.ne.s32.totalorder %s209, %s210
      %p224 = scmp.eq.s32.totalorder %s26, 3
      %p225 = por %p223, %p224
      %p227 = scmp.ne.s32.totalorder %s210, %s226
      %p228 = scmp.eq.s32.totalorder %s26, 0
      %p229 = por %p227, %p228
      %p230 = scmp.le.s32.totalorder 1, %s20
      %p231 = scmp.lt.s32.totalorder %s20, 5
      %p232 = pnand %p230, %p231
      %p233 = pneg %p232
      // Predicated region
      $region9: #{tpu_custom_call.1} parent=5 // pred_check
        _
      $region10: #{tpu_custom_call.1} parent=5 // pred_check_branch
        %235 = sbr.rel (%p232) target = $region12
      $region11: #{tpu_custom_call.1} parent=5 // pred_region
        %s236 = ssub.s32 %s20, 1
        // Predicated region
        $region13: #{tpu_custom_call.1} parent=11 // pred_check
          %p237 = pneg %p133
        $region14: #{tpu_custom_call.1} parent=11 // pred_check_branch
          %239 = sbr.rel (%p237) target = $region16
        $region15: #{tpu_custom_call.1} parent=11 // pred_region
          %s241 = ssub.s32 2048, 2048
          %242 = vsyncadd [#allocation7], %s241
          %s243 = sshll.u32 [#allocation6], 4
          %s244 = int_to_ptr.vmem [resolvable:$true] %s243
          %249 = dma.hbm_to_vmem [thread:$0]  %s3, 2048, %s244, [#allocation7], 128, 128, 8
        $region16: #{tpu_custom_call.1} parent=11 // pred_fallthru
          _
        // Predicated region
        $region17: #{tpu_custom_call.1} parent=11 // pred_check
          %p250 = pneg %p154
        $region18: #{tpu_custom_call.1} parent=11 // pred_check_branch
          %252 = sbr.rel (%p250) target = $region20
        $region19: #{tpu_custom_call.1} parent=11 // pred_region
          _
        $region20: #{tpu_custom_call.1} parent=11 // pred_fallthru
          _
        // Predicated region
        $region21: #{tpu_custom_call.1} parent=11 // pred_check
          %p253 = pneg %p175
        $region22: #{tpu_custom_call.1} parent=11 // pred_check_branch
          %255 = sbr.rel (%p253) target = $region24
        $region23: #{tpu_custom_call.1} parent=11 // pred_region
          _
        $region24: #{tpu_custom_call.1} parent=11 // pred_fallthru
          _
        // Predicated region
        $region25: #{tpu_custom_call.1} parent=11 // pred_check
          %p256 = pneg %p196
        $region26: #{tpu_custom_call.1} parent=11 // pred_check_branch
          %258 = sbr.rel (%p256) target = $region28
        $region27: #{tpu_custom_call.1} parent=11 // pred_region
          _
        $region28: #{tpu_custom_call.1} parent=11 // pred_fallthru
          _
      $region12: #{tpu_custom_call.1} parent=5 // pred_fallthru
        _
      %p259 = scmp.lt.s32.totalorder %s20, 4
      // Predicated region
      $region29: #{tpu_custom_call.1} parent=5 // pred_check
        %p260 = pneg %p259
      $region30: #{tpu_custom_call.1} parent=5 // pred_check_branch
        %262 = sbr.rel (%p260) target = $region32
      $region31: #{tpu_custom_call.1} parent=5 // pred_region
        // Predicated region
        $region33: #{tpu_custom_call.1} parent=31 // pred_check
          %p263 = pneg %p52
        $region34: #{tpu_custom_call.1} parent=31 // pred_check_branch
          %265 = sbr.rel (%p263) target = $region36
        $region35: #{tpu_custom_call.1} parent=31 // pred_region
          %p266 = scmp.lt.s32.totalorder %s27, 1
          %s267 = scalar_select %p266, %s27, 1
          %s268 = smul.addr %s267, 2
          %s269 = smul.addr %s268, 8
          %s270 = scalar_lea.vmem %s0, %s269
        $region36: #{tpu_custom_call.1} parent=31 // pred_fallthru
          _
        // Predicated region
        $region37: #{tpu_custom_call.1} parent=31 // pred_check
          %p271 = pneg %p80
        $region38: #{tpu_custom_call.1} parent=31 // pred_check_branch
          %273 = sbr.rel (%p271) target = $region40
        $region39: #{tpu_custom_call.1} parent=31 // pred_region
          %p274 = scmp.lt.s32.totalorder %s27, 1
          %s275 = scalar_select %p274, %s27, 1
          %p276 = scmp.lt.s32.totalorder %s28, 1
          %s277 = scalar_select %p276, %s28, 1
          %s278 = smul.addr %s275, 2
          %s279 = sadd.s32 %s277, %s278
          %s280 = smul.addr %s279, 8
          %s281 = scalar_lea.vmem %s1, %s280
        $region40: #{tpu_custom_call.1} parent=31 // pred_fallthru
          _
        // Predicated region
        $region41: #{tpu_custom_call.1} parent=31 // pred_check
          %p282 = pneg %p106
        $region42: #{tpu_custom_call.1} parent=31 // pred_check_branch
          %284 = sbr.rel (%p282) target = $region44
        $region43: #{tpu_custom_call.1} parent=31 // pred_region
          %s285 = sand.u32 %s96, 1
          %s286 = scalar_lea.sflag [#allocation4], %s285
          %s287 = sand.u32 %s96, 1
          %s288 = smul.addr %s287, 64
          %s289 = scalar_lea.vmem [#allocation3], %s288
          %s290 = smul.u32 8, %s28
          %s292 = ssub.s32 1024, 1024
          %293 = vsyncadd %s286, %s292
          %s294 = smul.addr %s290, 2
          %s295 = smul.addr %s294, 64
          %s296 = scalar_lea.hbm %s2, %s295
          %s297 = sshll.u32 %s289, 4
          %s298 = int_to_ptr.vmem [resolvable:$true] %s297
          %303 = dma.hbm_to_vmem [thread:$0]  %s296, 1024, %s298, %s286, 64, 64, 4
        $region44: #{tpu_custom_call.1} parent=31 // pred_fallthru
          _
      $region32: #{tpu_custom_call.1} parent=5 // pred_fallthru
        _
      %p304 = scmp.le.s32.totalorder 1, %s20
      %p305 = scmp.lt.s32.totalorder %s20, 5
      %p306 = pnand %p304, %p305
      %p307 = pneg %p306
      // Predicated region
      $region45: #{tpu_custom_call.1} parent=5 // pred_check
        _
      $region46: #{tpu_custom_call.1} parent=5 // pred_check_branch
        %309 = sbr.rel (%p306) target = $region48
      $region47: #{tpu_custom_call.1} parent=5 // pred_region
        %s310 = ssub.s32 %s20, 1
        %s311 = sand.u32 %s99, 1
        %s312 = scalar_lea.sflag [#allocation4], %s311
        %s313 = sand.u32 %s99, 1
        %s314 = smul.addr %s313, 64
        %s315 = scalar_lea.vmem [#allocation3], %s314
        // Predicated region
        $region49: #{tpu_custom_call.1} parent=47 // pred_check
          %p316 = pneg %p112
        $region50: #{tpu_custom_call.1} parent=47 // pred_check_branch
          %318 = sbr.rel (%p316) target = $region52
        $region51: #{tpu_custom_call.1} parent=47 // pred_region
          %319 = dma.done %s312, 1024
        $region52: #{tpu_custom_call.1} parent=47 // pred_fallthru
          _
        // Predicated region
        $region53: #{tpu_custom_call.1} parent=47 // pred_check
          %p320 = pneg %p133
        $region54: #{tpu_custom_call.1} parent=47 // pred_check_branch
          %322 = sbr.rel (%p320) target = $region56
        $region55: #{tpu_custom_call.1} parent=47 // pred_region
          %323 = dma.done [#allocation7], 2048
        $region56: #{tpu_custom_call.1} parent=47 // pred_fallthru
          _
        %p324 = scmp.lt.s32.totalorder %s29, 1
        %s325 = scalar_select %p324, %s29, 1
        %s326 = smul.addr %s325, 2
        %s327 = smul.addr %s326, 8
        %s328 = scalar_lea.vmem %s0, %s327
        %p329 = pneg %p58
        %p330 = pneg %p55
        %p331 = scmp.lt.s32.totalorder %s29, 1
        %s332 = scalar_select %p331, %s29, 1
        %p333 = scmp.lt.s32.totalorder %s30, 1
        %s334 = scalar_select %p333, %s30, 1
        %s335 = smul.addr %s332, 2
        %s336 = sadd.s32 %s334, %s335
        %s337 = smul.addr %s336, 8
        %s338 = scalar_lea.vmem %s1, %s337
        %p339 = pneg %p86
        %p340 = pneg %p83
        %s341 = sand.u32 %s99, 1
        %s342 = scalar_lea.sflag [#allocation4], %s341
        %s343 = sand.u32 %s99, 1
        %s344 = smul.addr %s343, 64
        %s345 = scalar_lea.vmem [#allocation3], %s344
        %p346 = pneg %p112
        %p347 = pneg %p109
        %p348 = pneg %p133
        %p349 = pneg %p130
        %p350 = pneg %p154
        %p351 = pneg %p151
        %p352 = pneg %p175
        %p353 = pneg %p172
        %p354 = pneg %p196
        %p355 = pneg %p193
        %p356 = pneg %p222
        %p357 = pneg %p219
        %s358 = sand.u32 %s209, 1
        %s359 = scalar_lea.sflag [#allocation5], %s358
        %s360 = sand.u32 %s209, 1
        %s361 = smul.addr %s360, 16
        %s362 = scalar_lea.vmem [#allocation8], %s361
        %p363 = scmp.lt.s32.totalorder %s29, 1
        %s364 = scalar_select %p363, %s29, 1
        %s365 = smul.addr %s364, 2
        %s366 = smul.addr %s365, 8
        %s367 = scalar_lea.vmem %s0, %s366
        %p368 = scmp.lt.s32.totalorder %s29, 1
        %s369 = scalar_select %p368, %s29, 1
        %p370 = scmp.lt.s32.totalorder %s30, 1
        %s371 = scalar_select %p370, %s30, 1
        %s372 = smul.addr %s369, 2
        %s373 = sadd.s32 %s371, %s372
        %s374 = smul.addr %s373, 8
        %s375 = scalar_lea.vmem %s1, %s374
        %s376 = smul.u32 8, %s30
        %v378 = vld [vmem:[%s5] sm:$0x1]
        %v379 = vld [vmem:[%s6] sm:$0x1]
        %p380 = scmp.eq.s32.totalorder %s30, 0
        // Predicated region
        $region57: #{tpu_custom_call.1} parent=47 // pred_check
          %p381 = pneg %p380
        $region58: #{tpu_custom_call.1} parent=47 // pred_check_branch
          %383 = sbr.rel (%p381) target = $region60
        $region59: #{tpu_custom_call.1} parent=47 // pred_region
          %384 = vst [vmem:[#allocation2] sm:$0xff] 0.0
          %385 = vst [vmem:[#allocation2 + $0x8] sm:$0xff] 0.0
        $region60: #{tpu_custom_call.1} parent=47 // pred_fallthru
          _
        %s386 = smul.u32 %s30, 8
        %s387 = scalar_lea.vmem %s367, %s386
        %v388 = vld [vmem:[%s387] sm:$0xff]
        %v389 = vld [vmem:[%s375] sm:$0xff]
        %391 = vset.pattern.permute.xlu0 0
        %392 = vperm.xlu0 %391, %v389
        %v393 = vpop.permute.xlu0 %392
        %v395 = vmul.f32 %v388, %v393
        %v396 = vld [vmem:[%s315] sm:$0xf]
        %v397 = vld [vmem:[%s315 + $0x4] sm:$0xf]
        %v398 = vld [vmem:[%s315 + $0x8] sm:$0xf]
        %v399 = vld [vmem:[%s315 + $0xc] sm:$0xf]
        %v400 = vld [vmem:[%s315 + $0x10] sm:$0xf]
        %v401 = vld [vmem:[%s315 + $0x14] sm:$0xf]
        %v402 = vld [vmem:[%s315 + $0x18] sm:$0xf]
        %v403 = vld [vmem:[%s315 + $0x1c] sm:$0xf]
        %v404 = vld [vmem:[%s315 + $0x20] sm:$0xf]
        %v405 = vld [vmem:[%s315 + $0x24] sm:$0xf]
        %v406 = vld [vmem:[%s315 + $0x28] sm:$0xf]
        %v407 = vld [vmem:[%s315 + $0x2c] sm:$0xf]
        %v408 = vld [vmem:[%s315 + $0x30] sm:$0xf]
        %v409 = vld [vmem:[%s315 + $0x34] sm:$0xf]
        %v410 = vld [vmem:[%s315 + $0x38] sm:$0xf]
        %v411 = vld [vmem:[%s315 + $0x3c] sm:$0xf]
        %v412 = vunpack.c.l.bf16 %v396
        %v413 = vunpack.c.l.bf16 %v397
        %v414 = vunpack.c.l.bf16 %v398
        %v415 = vunpack.c.l.bf16 %v399
        %v416 = vunpack.c.l.bf16 %v400
        %v417 = vunpack.c.l.bf16 %v401
        %v418 = vunpack.c.l.bf16 %v402
        %v419 = vunpack.c.l.bf16 %v403
        %v420 = vunpack.c.l.bf16 %v404
        %v421 = vunpack.c.l.bf16 %v405
        %v422 = vunpack.c.l.bf16 %v406
        %v423 = vunpack.c.l.bf16 %v407
        %v424 = vunpack.c.l.bf16 %v408
        %v425 = vunpack.c.l.bf16 %v409
        %v426 = vunpack.c.l.bf16 %v410
        %v427 = vunpack.c.l.bf16 %v411
        %v428 = vlaneseq
        %v429 = vshrl.u32 %v428, 7
        %v430 = vsub.s32 0, %v429
        %v431 = vrot.slane %v395, %v430
        %v432 = vmul.f32 %v412, %v431
        %v433 = vmul.f32 %v413, %v431
        %v434 = vlaneseq
        %v435 = vshrl.u32 %v434, 7
        %v436 = vsub.s32 1, %v435
        %v437 = vrot.slane %v395, %v436
        %v438 = vmul.f32 %v414, %v437
        %v439 = vmul.f32 %v415, %v437
        %v440 = vadd.f32 %v432, %v438
        %v441 = vadd.f32 %v433, %v439
        %v442 = vlaneseq
        %v443 = vshrl.u32 %v442, 7
        %v444 = vsub.s32 2, %v443
        %v445 = vrot.slane %v395, %v444
        %v446 = vmul.f32 %v416, %v445
        %v447 = vmul.f32 %v417, %v445
        %v448 = vadd.f32 %v440, %v446
        %v449 = vadd.f32 %v441, %v447
        %v450 = vlaneseq
        %v451 = vshrl.u32 %v450, 7
        %v452 = vsub.s32 3, %v451
        %v453 = vrot.slane %v395, %v452
        %v454 = vmul.f32 %v418, %v453
        %v455 = vmul.f32 %v419, %v453
        %v456 = vadd.f32 %v448, %v454
        %v457 = vadd.f32 %v449, %v455
        %v458 = vlaneseq
        %v459 = vshrl.u32 %v458, 7
        %v460 = vsub.s32 4, %v459
        %v461 = vrot.slane %v395, %v460
        %v462 = vmul.f32 %v420, %v461
        %v463 = vmul.f32 %v421, %v461
        %v464 = vadd.f32 %v456, %v462
        %v465 = vadd.f32 %v457, %v463
        %v466 = vlaneseq
        %v467 = vshrl.u32 %v466, 7
        %v468 = vsub.s32 5, %v467
        %v469 = vrot.slane %v395, %v468
        %v470 = vmul.f32 %v422, %v469
        %v471 = vmul.f32 %v423, %v469
        %v472 = vadd.f32 %v464, %v470
        %v473 = vadd.f32 %v465, %v471
        %v474 = vlaneseq
        %v475 = vshrl.u32 %v474, 7
        %v476 = vsub.s32 6, %v475
        %v477 = vrot.slane %v395, %v476
        %v478 = vmul.f32 %v424, %v477
        %v479 = vmul.f32 %v425, %v477
        %v480 = vadd.f32 %v472, %v478
        %v481 = vadd.f32 %v473, %v479
        %v482 = vlaneseq
        %v483 = vshrl.u32 %v482, 7
        %v484 = vsub.s32 7, %v483
        %v485 = vrot.slane %v395, %v484
        %v486 = vmul.f32 %v426, %v485
        %v487 = vmul.f32 %v427, %v485
        %v488 = vadd.f32 %v480, %v486
        %v489 = vadd.f32 %v481, %v487
        %v490 = vld [vmem:[#allocation2] sm:$0xff]
        %v491 = vld [vmem:[#allocation2 + $0x8] sm:$0xff]
        %v492 = vadd.f32 %v490, %v488
        %v493 = vadd.f32 %v491, %v489
        %494 = vst [vmem:[#allocation2] sm:$0xff] %v492
        %495 = vst [vmem:[#allocation2 + $0x8] sm:$0xff] %v493
        %p496 = scmp.eq.s32.totalorder %s30, 1
        // Predicated region
        $region61: #{tpu_custom_call.1} parent=47 // pred_check
          %p497 = pneg %p496
        $region62: #{tpu_custom_call.1} parent=47 // pred_check_branch
          %499 = sbr.rel (%p497) target = $region64
        $region63: #{tpu_custom_call.1} parent=47 // pred_region
          %v500 = vld [vmem:[#allocation2] sm:$0xff]
          %v501 = vld [vmem:[#allocation2 + $0x8] sm:$0xff]
          %v502 = vmul.f32 %v500, 0.5
          %v503 = vmul.f32 %v501, 0.5
          %v504 = vmul.f32 %v500, 0.044715
          %v505 = vmul.f32 %v501, 0.044715
          %v506 = vmul.f32 %v504, %v500
          %v507 = vmul.f32 %v505, %v501
          %v508 = vmul.f32 %v506, %v500
          %v509 = vmul.f32 %v507, %v501
          %v510 = vadd.f32 %v500, %v508
          %v511 = vadd.f32 %v501, %v509
          %v512 = vmul.f32 %v510, 0.7978846
          %v513 = vmul.f32 %v511, 0.7978846
          %v514 = vtanh.pop %v512
          %v515 = vtanh.pop %v513
          %v516 = vadd.f32 %v514, 1.0
          %v517 = vadd.f32 %v515, 1.0
          %v518 = vmul.f32 %v502, %v516
          %v519 = vmul.f32 %v503, %v517
          %v520 = vpack.c.bf16 %v519, %v518
          %v521 = vld [vmem:[#allocation6] sm:$0xff]
          %v522 = vld [vmem:[#allocation6 + $0x8] sm:$0xff]
          %v523 = vld [vmem:[#allocation6 + $0x10] sm:$0xff]
          %v524 = vld [vmem:[#allocation6 + $0x18] sm:$0xff]
          %v525 = vld [vmem:[#allocation6 + $0x20] sm:$0xff]
          %v526 = vld [vmem:[#allocation6 + $0x28] sm:$0xff]
          %v527 = vld [vmem:[#allocation6 + $0x30] sm:$0xff]
          %v528 = vld [vmem:[#allocation6 + $0x38] sm:$0xff]
          %v529 = vld [vmem:[#allocation6 + $0x40] sm:$0xff]
          %v530 = vld [vmem:[#allocation6 + $0x48] sm:$0xff]
          %v531 = vld [vmem:[#allocation6 + $0x50] sm:$0xff]
          %v532 = vld [vmem:[#allocation6 + $0x58] sm:$0xff]
          %v533 = vld [vmem:[#allocation6 + $0x60] sm:$0xff]
          %v534 = vld [vmem:[#allocation6 + $0x68] sm:$0xff]
          %v535 = vld [vmem:[#allocation6 + $0x70] sm:$0xff]
          %v536 = vld [vmem:[#allocation6 + $0x78] sm:$0xff]
          %v537 = vld [vmem:[%s4] sm:$0x3]
          %v539 = vlaneseq
          %v540 = vshrl.u32 %v539, 7
          %v541 = vsub.s32 0, %v540
          %v542 = vrot.slane %v537, %v541
          %v543 = vlaneseq
          %v544 = vshrl.u32 %v543, 7
          %v545 = vsub.s32 1, %v544
          %v546 = vrot.slane %v537, %v545
          %v565 = vunpack.c.l.b16 %v521
          %v566 = vunpack.c.h.b16 %v521
          %v567 = vunpack.c.l.b16 %v522
          %v568 = vunpack.c.h.b16 %v522
          %v569 = vunpack.c.l.b16 %v523
          %v570 = vunpack.c.h.b16 %v523
          %v571 = vunpack.c.l.b16 %v524
          %v572 = vunpack.c.h.b16 %v524
          %v573 = vunpack.c.l.b16 %v525
          %v574 = vunpack.c.h.b16 %v525
          %v575 = vunpack.c.l.b16 %v526
          %v576 = vunpack.c.h.b16 %v526
          %v577 = vunpack.c.l.b16 %v527
          %v578 = vunpack.c.h.b16 %v527
          %v579 = vunpack.c.l.b16 %v528
          %v580 = vunpack.c.h.b16 %v528
          %v581 = vunpack.c.l.b16 %v529
          %v582 = vunpack.c.h.b16 %v529
          %v583 = vunpack.c.l.b16 %v530
          %v584 = vunpack.c.h.b16 %v530
          %v585 = vunpack.c.l.b16 %v531
          %v586 = vunpack.c.h.b16 %v531
          %v587 = vunpack.c.l.b16 %v532
          %v588 = vunpack.c.h.b16 %v532
          %v589 = vunpack.c.l.b16 %v533
          %v590 = vunpack.c.h.b16 %v533
          %v591 = vunpack.c.l.b16 %v534
          %v592 = vunpack.c.h.b16 %v534
          %v593 = vunpack.c.l.b16 %v535
          %v594 = vunpack.c.h.b16 %v535
          %v595 = vunpack.c.l.b16 %v536
          %v596 = vunpack.c.h.b16 %v536
          %v597 = vpack.c.b16 %v567, %v565
          %v598 = vpack.c.b16 %v568, %v566
          %v599 = vpack.c.b16 %v571, %v569
          %v600 = vpack.c.b16 %v572, %v570
          %v601 = vpack.c.b16 %v575, %v573
          %v602 = vpack.c.b16 %v576, %v574
          %v603 = vpack.c.b16 %v579, %v577
          %v604 = vpack.c.b16 %v580, %v578
          %v605 = vpack.c.b16 %v583, %v581
          %v606 = vpack.c.b16 %v584, %v582
          %v607 = vpack.c.b16 %v587, %v585
          %v608 = vpack.c.b16 %v588, %v586
          %v609 = vpack.c.b16 %v591, %v589
          %v610 = vpack.c.b16 %v592, %v590
          %v611 = vpack.c.b16 %v595, %v593
          %v612 = vpack.c.b16 %v596, %v594
          %629 = vmatprep.subr.bf16.mxu0 %v612
          %630 = vmatpush1.bf16.msra.mxu0 %v611
          %631 = vmatprep.subr.bf16.mxu0 %v610
          %632 = vmatpush1.bf16.msra.mxu0 %v609
          %633 = vmatprep.subr.bf16.mxu0 %v608
          %634 = vmatpush1.bf16.msra.mxu0 %v607
          %635 = vmatprep.subr.bf16.mxu0 %v606
          %636 = vmatpush1.bf16.msra.mxu0 %v605
          %637 = vmatprep.subr.bf16.mxu0 %v604
          %638 = vmatpush1.bf16.msra.mxu0 %v603
          %639 = vmatprep.subr.bf16.mxu0 %v602
          %640 = vmatpush1.bf16.msra.mxu0 %v601
          %641 = vmatprep.subr.bf16.mxu0 %v600
          %642 = vmatpush1.bf16.msra.mxu0 %v599
          %643 = vmatprep.subr.bf16.mxu0 %v598
          %644 = vmatpush1.bf16.msra.mxu0 %v597
          %645 = vmatprep.subr.bf16.mxu0 0
          %646 = vmatpush2.bf16.msra.mxu0 0
          %647 = vmatprep.subr.bf16.mxu0 0
          %648 = vmatpush2.bf16.msra.mxu0 0
          %649 = vmatprep.subr.bf16.mxu0 0
          %650 = vmatpush2.bf16.msra.mxu0 0
          %651 = vmatprep.subr.bf16.mxu0 0
          %652 = vmatpush2.bf16.msra.mxu0 0
          %653 = vmatprep.subr.bf16.mxu0 0
          %654 = vmatpush2.bf16.msra.mxu0 0
          %655 = vmatprep.subr.bf16.mxu0 0
          %656 = vmatpush2.bf16.msra.mxu0 0
          %657 = vmatprep.subr.bf16.mxu0 0
          %658 = vmatpush2.bf16.msra.mxu0 0
          %659 = vmatprep.subr.bf16.mxu0 0
          %660 = vmatpush2.bf16.msra.mxu0 0
          %661 = vmatprep.mubr.bf16.mxu0 0
          %662 = vmatmul.mubr.bf16.gmra.mxu0 %v520
          %v663 = vpop.f32.mrf.mxu0
          %v664 = vadd.f32 %v542, %v663
          %v665 = vpop.f32.mrf.mxu0
          %v666 = vadd.f32 %v546, %v665
          %v667 = vpop.f32.mrf.mxu0
          %v668 = vadd.f32 %v542, %v667
          %v669 = vpop.f32.mrf.mxu0
          %v670 = vadd.f32 %v546, %v669
          %671 = vdwg.mxu0
          %v672 = vsub.f32 0.0, %v666
          %v673 = vsub.f32 0.0, %v670
          %v674 = vmul.f32 %v672, 1.442695
          %v675 = vpow.pop %v674
          %v676 = vmul.f32 %v673, 1.442695
          %v677 = vpow.pop %v676
          %v678 = vadd.f32 %v675, 1.0
          %v679 = vadd.f32 %v677, 1.0
          %v680 = vrcp.pop %v678
          %v681 = vrcp.pop %v679
          %v682 = vmul.f32 %v664, %v680
          %v683 = vmul.f32 %v668, %v681
          %v684 = vld [vmem:[%s367] sm:$0xff]
          %v685 = vld [vmem:[%s367 + $0x8] sm:$0xff]
          %v686 = vadd.f32 %v682, %v684
          %v687 = vadd.f32 %v683, %v685
          %688 = vadd.xlane.f32.xlu0 %v686
          %v689 = vpop.xlane.xlu0 %688
          %690 = vadd.xlane.f32.xlu0 %v687
          %v691 = vpop.xlane.xlu0 %690
          %v692 = vmul.f32 %v689, 0.03125
          %v693 = vmul.f32 %v691, 0.03125
          %v694 = vlaneseq
          %v695 = vand.u32 %v694, 127
          %vm696 = vcmp.lt.s32.totalorder %v695, 32
          %v697 = vsub.f32 %v686, %v692
          %v698 = vsub.f32 %v687, %v693
          %v699 = vsel %vm696, %v697, 0.0
          %v700 = vsel %vm696, %v698, 0.0
          %v701 = vmul.f32 %v699, %v699
          %v702 = vmul.f32 %v700, %v700
          %703 = vadd.xlane.f32.xlu0 %v701
          %v704 = vpop.xlane.xlu0 %703
          %705 = vadd.xlane.f32.xlu0 %v702
          %v706 = vpop.xlane.xlu0 %705
          %v707 = vmul.f32 %v704, 0.03125
          %v708 = vmul.f32 %v706, 0.03125
          %v709 = vadd.f32 %v707, 1e-05
          %v710 = vadd.f32 %v708, 1e-05
          %v711 = vrsqrt.pop %v709
          %v712 = vrsqrt.pop %v710
          %v713 = vmul.f32 %v699, %v711
          %v714 = vmul.f32 %v700, %v712
          %v716 = vlaneseq
          %v717 = vshrl.u32 %v716, 7
          %v718 = vsub.s32 0, %v717
          %v719 = vrot.slane %v378, %v718
          %v721 = vmul.f32 %v713, %v719
          %v722 = vmul.f32 %v714, %v719
          %v724 = vlaneseq
          %v725 = vshrl.u32 %v724, 7
          %v726 = vsub.s32 0, %v725
          %v727 = vrot.slane %v379, %v726
          %v729 = vadd.f32 %v721, %v727
          %v730 = vadd.f32 %v722, %v727
          %731 = vst [vmem:[%s362] sm:$0xff] %v729
          %732 = vst [vmem:[%s362 + $0x8] sm:$0xff] %v730
        $region64: #{tpu_custom_call.1} parent=47 // pred_fallthru
          _
        %s733 = sand.u32 %s209, 1
        %s734 = scalar_lea.sflag [#allocation5], %s733
        %s735 = sand.u32 %s209, 1
        %s736 = smul.addr %s735, 16
        %s737 = scalar_lea.vmem [#allocation8], %s736
        // Predicated region
        $region65: #{tpu_custom_call.1} parent=47 // pred_check
          %p738 = pneg %p219
        $region66: #{tpu_custom_call.1} parent=47 // pred_check_branch
          %740 = sbr.rel (%p738) target = $region68
        $region67: #{tpu_custom_call.1} parent=47 // pred_region
          %s742 = ssub.s32 256, 256
          %743 = vsyncadd %s734, %s742
          %s744 = smul.addr %s29, 2
          %s745 = smul.addr %s744, 128
          %s746 = scalar_lea.hbm %s7, %s745
          %s747 = sshll.u32 %s737, 4
          %s748 = int_to_ptr.vmem [resolvable:$true] %s747
          %753 = dma.vmem_to_hbm [thread:$0]  %s748, 256, %s746, %s734, 128, 128, 8
        $region68: #{tpu_custom_call.1} parent=47 // pred_fallthru
          _
      $region48: #{tpu_custom_call.1} parent=5 // pred_fallthru
        _
      %p754 = scmp.le.s32.totalorder 2, %s20
      // Predicated region
      $region69: #{tpu_custom_call.1} parent=5 // pred_check
        %p755 = pneg %p754
      $region70: #{tpu_custom_call.1} parent=5 // pred_check_branch
        %757 = sbr.rel (%p755) target = $region72
      $region71: #{tpu_custom_call.1} parent=5 // pred_region
        %s758 = ssub.s32 %s20, 2
        // Predicated region
        $region73: #{tpu_custom_call.1} parent=71 // pred_check
          %p759 = pneg %p225
        $region74: #{tpu_custom_call.1} parent=71 // pred_check_branch
          %761 = sbr.rel (%p759) target = $region76
        $region75: #{tpu_custom_call.1} parent=71 // pred_region
          %s762 = sand.u32 %s210, 1
          %s763 = scalar_lea.sflag [#allocation5], %s762
          %s764 = sand.u32 %s210, 1
          %s765 = smul.addr %s764, 16
          %s766 = scalar_lea.vmem [#allocation8], %s765
          %767 = dma.done %s763, 256
        $region76: #{tpu_custom_call.1} parent=71 // pred_fallthru
          _
      $region72: #{tpu_custom_call.1} parent=5 // pred_fallthru
        _
    $region6: #{tpu_custom_call.1} parent=1 // loop_footer
      %s24 = sadd.s32 1, %s20
    $region7: #{tpu_custom_call.1} parent=1 // loop_footer_branch
      %19 = sbr.rel target = $region3
    $region8: #{tpu_custom_call.1} parent=1 // loop_exit
      _
    %768 = vsyncpa [#allocation4], 1
    %s769 = scalar_lea.sflag [#allocation4], 1
    %770 = vsyncpa %s769, 1
    %771 = vsyncpa [#allocation7], 1
    %772 = vsyncpa [#allocation5], 1
    %s773 = scalar_lea.sflag [#allocation5], 1
    %774 = vsyncpa %s773, 1

</llo_original>
